<compile_context>
chip_gen: v7x
topology: tpu7x:2x2x1
jax: 0.10.0
libtpu: 0.0.40
codegen_flags: <defaults>
</compile_context>

<pallas_src>
import jax
import jax.numpy as jnp
import numpy as np
from jax import lax
from jax.experimental import pallas as pl
from jax.experimental.pallas import tpu as pltpu

NEG_SLOPE = 0.2
BN_EPS = 1e-5

_TM_MAX = 256                 # rows per tile (multiple of 8)
_TN = 128                     # output-channel lanes per tile (lane-dense stores)
_TK_CANDIDATES = (512, 256, 128)


def _round_up(v, m):
    return (v + m - 1) // m * m


# ------------------------------ Pallas kernel -------------------------------

def _make_conv_kernel(apply_act, fuse_bn):
    """Tiled im2col conv: (tm,tk)x(tk,tn) MXU matmul into an f32 VMEM accumulator.
    Optional fused prologue (folded BatchNorm + LeakyReLU, applied per K column)
    and fused epilogue (bias [+ LeakyReLU]) on the last K step."""

    def kernel(*refs):
        if fuse_bn:
            scale_ref, shift_ref, p_ref, w_ref, b_ref, o_ref, acc_ref = refs
        else:
            p_ref, w_ref, b_ref, o_ref, acc_ref = refs

        k = pl.program_id(2)

        @pl.when(k == 0)
        def _():
            acc_ref[...] = jnp.zeros_like(acc_ref)

        p = p_ref[...]
        if fuse_bn:
            # folded BatchNorm (scale/shift per input channel -> per K column)
            # + LeakyReLU, then back to the MXU dtype.  VPU work: free filler
            # under the MXU-bound matmul.
            pf = p.astype(jnp.float32) * scale_ref[...] + shift_ref[...]
            pf = jnp.where(pf >= 0.0, pf, NEG_SLOPE * pf)
            p = pf.astype(p_ref.dtype)

        acc_ref[...] += jnp.dot(p, w_ref[...], preferred_element_type=jnp.float32)

        @pl.when(k == pl.num_programs(2) - 1)
        def _():
            y = acc_ref[...] + b_ref[...]          # bias added once, in epilogue
            if apply_act:
                y = jnp.where(y >= 0.0, y, NEG_SLOPE * y)
            o_ref[...] = y.astype(o_ref.dtype)

    return kernel


# ------------------------------- glue (JAX) ---------------------------------

def _im2col_nhwc(x, k, s, p, pad_value=None):
    """x: (N, H, W, C) -> patches (N*OH*OW, KH*KW*C); K ordered (kh, kw, cin).
    pad_value: optional per-channel (C,) spatial padding value (default zeros)."""
    # TODO(synk): for large inputs, avoid materializing the im2col slab in HBM
    # (read strided windows directly via BlockSpec index_maps over the KHxKW taps).
    n, h, w, c = x.shape
    if p > 0:
        if pad_value is None:
            xpad = jnp.pad(x, ((0, 0), (p, p), (p, p), (0, 0)))
        else:
            xpad = jnp.broadcast_to(pad_value.reshape(1, 1, 1, c).astype(x.dtype),
                                    (n, h + 2 * p, w + 2 * p, c))
            xpad = xpad.at[:, p:p + h, p:p + w, :].set(x)
    else:
        xpad = x
    hp, wp = h + 2 * p, w + 2 * p
    oh = (hp - k) // s + 1
    ow = (wp - k) // s + 1
    cols = []
    for kh in range(k):
        for kw in range(k):
            cols.append(xpad[:, kh:kh + s * oh:s, kw:kw + s * ow:s, :])
    patches = jnp.stack(cols, axis=3)               # (N, OH, OW, KH*KW, C)
    patches = patches.reshape(n * oh * ow, k * k * c)
    return patches, n, oh, ow


def _conv2d_pallas(x_nhwc, weight, bias, *, stride, padding, apply_act,
                   bn_scale=None, bn_shift=None, compute_dtype=jnp.bfloat16):
    """Conv2d on a channels-last input via a tiled Pallas im2col matmul.
    Returns ((M, Cout) f32 slab, N, OH, OW)."""
    cout, cin, ksz, _ = weight.shape
    fuse_bn = bn_scale is not None

    # Fused BN+LReLU prologue: pad spatially with v = -shift/scale per channel
    # so that lrelu(scale*v + shift) == 0, matching the reference ordering
    # (zero padding applied AFTER BN+LReLU).  gamma==0 (scale==0) degenerates
    # to zero padding; border taps deviate only in that pathological config.
    pad_value = None
    if fuse_bn:
        safe = jnp.where(bn_scale == 0.0, 1.0, bn_scale)
        pad_value = jnp.where(bn_scale == 0.0, 0.0, -bn_shift / safe)

    patches, n, oh, ow = _im2col_nhwc(x_nhwc, ksz, stride, padding, pad_value)
    m, kdim = patches.shape

    # weights: (Cout, Cin, KH, KW) -> (KH*KW*Cin, Cout), matching patch K order
    w2d = weight.transpose(2, 3, 1, 0).reshape(kdim, cout)

    # Pad to MXU / lane friendly sizes (K and Cout multiples of 128).
    k_pad = _round_up(kdim, 128)
    n_pad = _round_up(cout, _TN)
    tm = min(_TM_MAX, _round_up(m, 8))
    m_pad = _round_up(m, tm)
    tk = next(t for t in _TK_CANDIDATES if k_pad % t == 0)
    tn = _TN

    p_pad = jnp.pad(patches, ((0, m_pad - m), (0, k_pad - kdim))).astype(compute_dtype)
    w_pad = jnp.pad(w2d, ((0, k_pad - kdim), (0, n_pad - cout))).astype(compute_dtype)
    b_pad = jnp.pad(bias, (0, n_pad - cout)).reshape(1, n_pad).astype(jnp.float32)

    in_specs = []
    args = []
    if fuse_bn:
        scale_k = jnp.pad(jnp.tile(bn_scale, ksz * ksz), (0, k_pad - kdim))
        shift_k = jnp.pad(jnp.tile(bn_shift, ksz * ksz), (0, k_pad - kdim))
        in_specs += [pl.BlockSpec((1, tk), lambda i, j, k: (0, k)),
                     pl.BlockSpec((1, tk), lambda i, j, k: (0, k))]
        args += [scale_k.reshape(1, k_pad).astype(jnp.float32),
                 shift_k.reshape(1, k_pad).astype(jnp.float32)]
    in_specs += [pl.BlockSpec((tm, tk), lambda i, j, k: (i, k)),
                 pl.BlockSpec((tk, tn), lambda i, j, k: (k, j)),
                 pl.BlockSpec((1, tn), lambda i, j, k: (0, j))]
    args += [p_pad, w_pad, b_pad]

    grid = (m_pad // tm, n_pad // tn, k_pad // tk)
    itemsize = jnp.dtype(compute_dtype).itemsize
    cost = pl.CostEstimate(
        flops=2 * m_pad * k_pad * n_pad,
        transcendentals=0,
        bytes_accessed=(m_pad * k_pad + k_pad * n_pad) * itemsize + m_pad * n_pad * 4)

    out = pl.pallas_call(
        _make_conv_kernel(apply_act=apply_act, fuse_bn=fuse_bn),
        out_shape=jax.ShapeDtypeStruct((m_pad, n_pad), jnp.float32),
        grid_spec=pltpu.PrefetchScalarGridSpec(
            num_scalar_prefetch=0,
            grid=grid,
            in_specs=in_specs,
            out_specs=pl.BlockSpec((tm, tn), lambda i, j, k: (i, j)),
            scratch_shapes=[pltpu.VMEM((tm, tn), jnp.float32)]),
        compiler_params=pltpu.CompilerParams(
            dimension_semantics=("parallel", "parallel", "arbitrary")),
        cost_estimate=cost,
    )(*args)

    return out[:m, :cout], n, oh, ow


# --------------------------- parameters / model -----------------------------

def init_params(key, in_channels=6):
    """Deterministic init mirroring PyTorch Conv2d default (uniform +/- 1/sqrt(fan_in))."""
    ks = jax.random.split(key, 6)

    def conv_init(kw_, kb_, cout, cin, k):
        fan_in = cin * k * k
        bound = 1.0 / np.sqrt(fan_in)
        w = jax.random.uniform(kw_, (cout, cin, k, k), jnp.float32, -bound, bound)
        b = jax.random.uniform(kb_, (cout,), jnp.float32, -bound, bound)
        return w, b

    w1, b1 = conv_init(ks[0], ks[1], 64, in_channels, 4)
    w2, b2 = conv_init(ks[2], ks[3], 128, 64, 4)
    w3, b3 = conv_init(ks[4], ks[5], 1, 128, 4)
    gamma = jnp.ones((128,), jnp.float32)   # BatchNorm2d default weight
    beta = jnp.zeros((128,), jnp.float32)   # BatchNorm2d default bias
    return dict(w1=w1, b1=b1, w2=w2, b2=b2, gamma=gamma, beta=beta, w3=w3, b3=b3)


def patch_discriminator(params, x, compute_dtype=jnp.bfloat16):
    """Conv(6->64,4,2,1)+LReLU -> Conv(64->128,4,2,1) -> BN+LReLU (fused into
    the next conv's prologue) -> Conv(128->1,4,1,1).  x is NCHW at the module
    boundary; everything in between stays channels-last."""
    xh = jnp.transpose(x, (0, 2, 3, 1))                               # NHWC once

    h1, n, oh, ow = _conv2d_pallas(xh, params["w1"], params["b1"],
                                   stride=2, padding=1, apply_act=True,
                                   compute_dtype=compute_dtype)
    h1 = h1.reshape(n, oh, ow, -1)

    h2, n, oh, ow = _conv2d_pallas(h1, params["w2"], params["b2"],
                                   stride=2, padding=1, apply_act=False,
                                   compute_dtype=compute_dtype)
    # training-mode BatchNorm2d: biased batch stats over (N,H,W) == slab rows
    mean = jnp.mean(h2, axis=0)
    var = jnp.var(h2, axis=0)
    scale = params["gamma"] / jnp.sqrt(var + BN_EPS)
    shift = params["beta"] - mean * scale
    h2 = h2.reshape(n, oh, ow, -1)

    h3, n, oh, ow = _conv2d_pallas(h2, params["w3"], params["b3"],
                                   stride=1, padding=1, apply_act=False,
                                   bn_scale=scale, bn_shift=shift,
                                   compute_dtype=compute_dtype)
    return h3.reshape(n, oh, ow, 1).transpose(0, 3, 1, 2)             # NCHW once


# ------------------------------ reference (JAX) ------------------------------

def _ref_forward(params, x):
    def conv(z, w, b, s, p):
        y = lax.conv_general_dilated(z, w, (s, s), ((p, p), (p, p)),
                                     dimension_numbers=("NCHW", "OIHW", "NCHW"))
        return y + b.reshape(1, -1, 1, 1)

    def lrelu(z):
        return jnp.where(z >= 0, z, NEG_SLOPE * z)

    h = lrelu(conv(x, params["w1"], params["b1"], 2, 1))
    h = conv(h, params["w2"], params["b2"], 2, 1)
    mean = jnp.mean(h, axis=(0, 2, 3), keepdims=True)
    var = jnp.var(h, axis=(0, 2, 3), keepdims=True)
    h = (h - mean) / jnp.sqrt(var + BN_EPS)
    h = h * params["gamma"].reshape(1, -1, 1, 1) + params["beta"].reshape(1, -1, 1, 1)
    h = lrelu(h)
    h = conv(h, params["w3"], params["b3"], 1, 1)
    return h


if __name__ == "__main__":
    key = jax.random.PRNGKey(0)
    kx, kp = jax.random.split(key)
    x = jax.random.normal(kx, (2, 6, 16, 16), jnp.float32)   # NCHW, batch=2
    params = init_params(kp, in_channels=6)

    ref = jax.block_until_ready(_ref_forward(params, x))

    # Structural / numerical check with f32 MXU operands -> tight tolerance.
    out_f32 = jax.block_until_ready(
        patch_discriminator(params, x, compute_dtype=jnp.float32))
    assert out_f32.shape == (2, 1, 3, 3), out_f32.shape
    np.testing.assert_allclose(np.asarray(out_f32), np.asarray(ref),
                               rtol=1e-4, atol=1e-4)

    # Performance config: bf16 MXU operands + f32 accumulation -> loose tolerance.
    out_bf16 = jax.block_until_ready(
        patch_discriminator(params, x, compute_dtype=jnp.bfloat16))
    assert out_bf16.shape == (2, 1, 3, 3), out_bf16.shape
    np.testing.assert_allclose(np.asarray(out_bf16), np.asarray(ref),
                               rtol=5e-2, atol=5e-2)

    print("KERNEL_OK")
</pallas_src>

<mosaic_0001>
module attributes {stable_mosaic.version = 11 : i64} {
  func.func @kernel(%arg0: i32, %arg1: i32, %arg2: i32, %arg3: memref<128x128xf32, #tpu.memory_space<vmem>>, %arg4: memref<128x128xf32, #tpu.memory_space<vmem>>, %arg5: memref<1x128xf32, #tpu.memory_space<vmem>>, %arg6: memref<128x128xf32, #tpu.memory_space<vmem>>, %arg7: memref<128x128xf32, #tpu.memory_space<vmem>>) attributes {dimension_semantics = [#tpu.dimension_semantics<parallel>, #tpu.dimension_semantics<parallel>, #tpu.dimension_semantics<arbitrary>], iteration_bounds = array<i64: 1, 1, 1>, scalar_prefetch = 0 : i64, scratch_operands = 1 : i64, tpu.core_type = #tpu.core_type<tc>, window_params = [{transform_indices = @transform_0, window_bounds = array<i64: 128, 128>}, {transform_indices = @transform_1, window_bounds = array<i64: 128, 128>}, {transform_indices = @transform_2, window_bounds = array<i64: 1, 128>}, {transform_indices = @transform_3, window_bounds = array<i64: 128, 128>}]} {
    %c0_i32 = arith.constant 0 : i32
    %0 = arith.cmpi eq, %arg2, %c0_i32 : i32
    %1 = arith.extui %0 : i1 to i32
    %c0_i32_0 = arith.constant 0 : i32
    %2 = arith.cmpi ne, %1, %c0_i32_0 : i32
    scf.if %2 {
      %cst_10 = arith.constant 0.000000e+00 : f32
      %12 = vector.broadcast %cst_10 : f32 to vector<128x128xf32>
      %c0_11 = arith.constant 0 : index
      %c0_12 = arith.constant 0 : index
      %13 = vector.load %arg7[%c0_11, %c0_12] : memref<128x128xf32, #tpu.memory_space<vmem>>, vector<128x128xf32>
      tpu.vector_store %arg7[%c0_11, %c0_12], %12 {strides = array<i32>} : memref<128x128xf32, #tpu.memory_space<vmem>>, vector<128x128xf32>,
    } else {
    }
    %c0 = arith.constant 0 : index
    %c0_1 = arith.constant 0 : index
    %3 = vector.load %arg3[%c0, %c0_1] : memref<128x128xf32, #tpu.memory_space<vmem>>, vector<128x128xf32>
    %c0_2 = arith.constant 0 : index
    %c0_3 = arith.constant 0 : index
    %4 = vector.load %arg7[%c0_2, %c0_3] : memref<128x128xf32, #tpu.memory_space<vmem>>, vector<128x128xf32>
    %c0_4 = arith.constant 0 : index
    %c0_5 = arith.constant 0 : index
    %5 = vector.load %arg4[%c0_4, %c0_5] : memref<128x128xf32, #tpu.memory_space<vmem>>, vector<128x128xf32>
    %cst = arith.constant dense<0.000000e+00> : vector<128x128xf32>
    %6 = tpu.matmul %3, %5, %cst {dimension_numbers = #tpu.dot_dimension_numbers<[1], [0], [0], [1], [0, 0, 1, 1], [], []>} : vector<128x128xf32>, vector<128x128xf32>, vector<128x128xf32> -> vector<128x128xf32>
    %7 = arith.addf %4, %6 : vector<128x128xf32>
    %c0_6 = arith.constant 0 : index
    %c0_7 = arith.constant 0 : index
    %8 = vector.load %arg7[%c0_6, %c0_7] : memref<128x128xf32, #tpu.memory_space<vmem>>, vector<128x128xf32>
    tpu.vector_store %arg7[%c0_6, %c0_7], %7 {strides = array<i32>} : memref<128x128xf32, #tpu.memory_space<vmem>>, vector<128x128xf32>,
    %c0_i32_8 = arith.constant 0 : i32
    %9 = arith.cmpi eq, %arg2, %c0_i32_8 : i32
    %10 = arith.extui %9 : i1 to i32
    %c0_i32_9 = arith.constant 0 : i32
    %11 = arith.cmpi ne, %10, %c0_i32_9 : i32
    scf.if %11 {
      %c0_10 = arith.constant 0 : index
      %c0_11 = arith.constant 0 : index
      %12 = vector.load %arg7[%c0_10, %c0_11] : memref<128x128xf32, #tpu.memory_space<vmem>>, vector<128x128xf32>
      %c0_12 = arith.constant 0 : index
      %c0_13 = arith.constant 0 : index
      %13 = vector.load %arg5[%c0_12, %c0_13] : memref<1x128xf32, #tpu.memory_space<vmem>>, vector<1x128xf32>
      %14 = vector.broadcast %13 : vector<1x128xf32> to vector<128x128xf32>
      %15 = arith.addf %12, %14 : vector<128x128xf32>
      %cst_14 = arith.constant 0.000000e+00 : f32
      %16 = vector.broadcast %cst_14 : f32 to vector<128x128xf32>
      %17 = arith.cmpf oge, %15, %16 : vector<128x128xf32>
      %cst_15 = arith.constant 2.000000e-01 : f32
      %18 = vector.broadcast %cst_15 : f32 to vector<128x128xf32>
      %19 = arith.mulf %18, %15 : vector<128x128xf32>
      %20 = arith.select %17, %15, %19 : vector<128x128xi1>, vector<128x128xf32>
      %c0_16 = arith.constant 0 : index
      %c0_17 = arith.constant 0 : index
      %21 = vector.load %arg6[%c0_16, %c0_17] : memref<128x128xf32, #tpu.memory_space<vmem>>, vector<128x128xf32>
      tpu.vector_store %arg6[%c0_16, %c0_17], %20 {strides = array<i32>} : memref<128x128xf32, #tpu.memory_space<vmem>>, vector<128x128xf32>,
    } else {
    }
    return
  }
  func.func @transform_0(%arg0: i32, %arg1: i32, %arg2: i32) -> (i32, i32) {
    %c0_i32 = arith.constant 0 : i32
    return %arg0, %arg2 : i32, i32
  }
  func.func @transform_1(%arg0: i32, %arg1: i32, %arg2: i32) -> (i32, i32) {
    %c0_i32 = arith.constant 0 : i32
    return %arg2, %arg1 : i32, i32
  }
  func.func @transform_2(%arg0: i32, %arg1: i32, %arg2: i32) -> (i32, i32) {
    %c0_i32 = arith.constant 0 : i32
    %c0_i32_0 = arith.constant 0 : i32
    return %c0_i32, %arg1 : i32, i32
  }
  func.func @transform_3(%arg0: i32, %arg1: i32, %arg2: i32) -> (i32, i32) {
    %c0_i32 = arith.constant 0 : i32
    return %arg0, %arg1 : i32, i32
  }
}

</mosaic_0001>

<llo_original>
// kernel: tpu_custom_call.1
$region0: #{tpu_custom_call.1}
  #allocation0 [shape = 'u32[]', space=smem, size = 0x4, offset = 0x4, fixed_abs, tag = 'smem constant byte address 0x4 - core index']
  #allocation1 [shape = 'u32[144,128]{1,0:T(1,128)}', space=vmem, size = 0x12000, scoped, tag = 'internal scratch']
  #allocation2 [shape = 'f32[128,128]{1,0:T(8,128)}', space=vmem, size = 0x10000, scoped, tag = 'scratch operand']
  %s0 = inlined_call_operand.hbm [shape: f32[128,128], index: 0, kind: input, shape index: {}]
  %s1 = inlined_call_operand.hbm [shape: f32[128,128], index: 1, kind: input, shape index: {}]
  %s2 = inlined_call_operand.vmem [shape: f32[1,128], index: 2, kind: input, shape index: {}]
  %s3 = inlined_call_operand.hbm [shape: f32[128,128], index: 3, kind: output, shape index: {}]
  %s4 = sld [smem:[#allocation0]]
  $region38: #{tpu_custom_call.1} parent=0
    _
  %s6 = ssub.s32 1, %s4
  %s7 = scalar_select 0, %s6, %s4
  $region1: #{tpu_custom_call.1} parent=0
    #allocation3 [shape = 'u8[65536]{0}', space=vmem, size = 0x10000, scoped, tag = 'input window, operand 0, single buffered']
    #allocation4 [shape = 's32[1]{0}', space=sflag, size = 0x4, scoped, tag = 'scoped memory for tpu_custom_call.1']
    #allocation5 [shape = 's32[1]{0}', space=sflag, size = 0x4, scoped, tag = 'scoped memory for tpu_custom_call.1']
    #allocation6 [shape = 'u8[65536]{0}', space=vmem, size = 0x10000, scoped, tag = 'input window, operand 1, single buffered']
    #allocation7 [shape = 's32[1]{0}', space=sflag, size = 0x4, scoped, tag = 'scoped memory for tpu_custom_call.1']
    #allocation8 [shape = 'u8[65536]{0}', space=vmem, size = 0x10000, scoped, tag = 'output window, operand 0, single buffered']
    %8 = vsyncpa [#allocation4], 0
    %9 = vsyncpa [#allocation7], 0
    %10 = vsyncpa [#allocation5], 0
    // Predicated region
    $region2: #{tpu_custom_call.1} parent=1 // pred_check
      _
    $region3: #{tpu_custom_call.1} parent=1 // pred_check_branch
      %12 = sbr.rel (0) target = $region5
    $region4: #{tpu_custom_call.1} parent=1 // pred_region
      %s14 = ssub.s32 2048, 2048
      %15 = vsyncadd [#allocation4], %s14
      %s16 = sshll.u32 [#allocation3], 4
      %s17 = int_to_ptr.vmem [resolvable:$true] %s16
      %22 = dma.hbm_to_vmem [thread:$0]  %s0, 2048, %s17, [#allocation4], 128, 128, 8
    $region5: #{tpu_custom_call.1} parent=1 // pred_fallthru
      _
    // Predicated region
    $region6: #{tpu_custom_call.1} parent=1 // pred_check
      _
    $region7: #{tpu_custom_call.1} parent=1 // pred_check_branch
      %24 = sbr.rel (0) target = $region9
    $region8: #{tpu_custom_call.1} parent=1 // pred_region
      %s26 = ssub.s32 2048, 2048
      %27 = vsyncadd [#allocation7], %s26
      %s28 = sshll.u32 [#allocation6], 4
      %s29 = int_to_ptr.vmem [resolvable:$true] %s28
      %34 = dma.hbm_to_vmem [thread:$0]  %s1, 2048, %s29, [#allocation7], 128, 128, 8
    $region9: #{tpu_custom_call.1} parent=1 // pred_fallthru
      _
    // Predicated region
    $region10: #{tpu_custom_call.1} parent=1 // pred_check
      _
    $region11: #{tpu_custom_call.1} parent=1 // pred_check_branch
      %36 = sbr.rel (0) target = $region13
    $region12: #{tpu_custom_call.1} parent=1 // pred_region
      _
    $region13: #{tpu_custom_call.1} parent=1 // pred_fallthru
      _
    // Predicated region
    $region14: #{tpu_custom_call.1} parent=1 // pred_check
      _
    $region15: #{tpu_custom_call.1} parent=1 // pred_check_branch
      %38 = sbr.rel (0) target = $region17
    $region16: #{tpu_custom_call.1} parent=1 // pred_region
      %39 = dma.done [#allocation4], 2048
    $region17: #{tpu_custom_call.1} parent=1 // pred_fallthru
      _
    // Predicated region
    $region18: #{tpu_custom_call.1} parent=1 // pred_check
      _
    $region19: #{tpu_custom_call.1} parent=1 // pred_check_branch
      %41 = sbr.rel (0) target = $region21
    $region20: #{tpu_custom_call.1} parent=1 // pred_region
      %42 = dma.done [#allocation7], 2048
    $region21: #{tpu_custom_call.1} parent=1 // pred_fallthru
      _
    %p43 = scmp.eq.s32.totalorder 0, 0
    // Predicated region
    $region22: #{tpu_custom_call.1} parent=1 // pred_check
      %p44 = pneg %p43
    $region23: #{tpu_custom_call.1} parent=1 // pred_check_branch
      %46 = sbr.rel (%p44) target = $region25
    $region24: #{tpu_custom_call.1} parent=1 // pred_region
      %47 = vst [vmem:[#allocation2] sm:$0xff] 0.0
      %48 = vst [vmem:[#allocation2 + $0x8] sm:$0xff] 0.0
      %49 = vst [vmem:[#allocation2 + $0x10] sm:$0xff] 0.0
      %50 = vst [vmem:[#allocation2 + $0x18] sm:$0xff] 0.0
      %51 = vst [vmem:[#allocation2 + $0x20] sm:$0xff] 0.0
      %52 = vst [vmem:[#allocation2 + $0x28] sm:$0xff] 0.0
      %53 = vst [vmem:[#allocation2 + $0x30] sm:$0xff] 0.0
      %54 = vst [vmem:[#allocation2 + $0x38] sm:$0xff] 0.0
      %55 = vst [vmem:[#allocation2 + $0x40] sm:$0xff] 0.0
      %56 = vst [vmem:[#allocation2 + $0x48] sm:$0xff] 0.0
      %57 = vst [vmem:[#allocation2 + $0x50] sm:$0xff] 0.0
      %58 = vst [vmem:[#allocation2 + $0x58] sm:$0xff] 0.0
      %59 = vst [vmem:[#allocation2 + $0x60] sm:$0xff] 0.0
      %60 = vst [vmem:[#allocation2 + $0x68] sm:$0xff] 0.0
      %61 = vst [vmem:[#allocation2 + $0x70] sm:$0xff] 0.0
      %62 = vst [vmem:[#allocation2 + $0x78] sm:$0xff] 0.0
    $region25: #{tpu_custom_call.1} parent=1 // pred_fallthru
      _
    %v63 = vld [vmem:[#allocation3] sm:$0xff]
    %v64 = vld [vmem:[#allocation3 + $0x8] sm:$0xff]
    %v65 = vld [vmem:[#allocation3 + $0x10] sm:$0xff]
    %v66 = vld [vmem:[#allocation3 + $0x18] sm:$0xff]
    %v67 = vld [vmem:[#allocation3 + $0x20] sm:$0xff]
    %v68 = vld [vmem:[#allocation3 + $0x28] sm:$0xff]
    %v69 = vld [vmem:[#allocation3 + $0x30] sm:$0xff]
    %v70 = vld [vmem:[#allocation3 + $0x38] sm:$0xff]
    %v71 = vld [vmem:[#allocation3 + $0x40] sm:$0xff]
    %v72 = vld [vmem:[#allocation3 + $0x48] sm:$0xff]
    %v73 = vld [vmem:[#allocation3 + $0x50] sm:$0xff]
    %v74 = vld [vmem:[#allocation3 + $0x58] sm:$0xff]
    %v75 = vld [vmem:[#allocation3 + $0x60] sm:$0xff]
    %v76 = vld [vmem:[#allocation3 + $0x68] sm:$0xff]
    %v77 = vld [vmem:[#allocation3 + $0x70] sm:$0xff]
    %v78 = vld [vmem:[#allocation3 + $0x78] sm:$0xff]
    %v79 = vld [vmem:[#allocation2] sm:$0xff]
    %v80 = vld [vmem:[#allocation2 + $0x8] sm:$0xff]
    %v81 = vld [vmem:[#allocation2 + $0x10] sm:$0xff]
    %v82 = vld [vmem:[#allocation2 + $0x18] sm:$0xff]
    %v83 = vld [vmem:[#allocation2 + $0x20] sm:$0xff]
    %v84 = vld [vmem:[#allocation2 + $0x28] sm:$0xff]
    %v85 = vld [vmem:[#allocation2 + $0x30] sm:$0xff]
    %v86 = vld [vmem:[#allocation2 + $0x38] sm:$0xff]
    %v87 = vld [vmem:[#allocation2 + $0x40] sm:$0xff]
    %v88 = vld [vmem:[#allocation2 + $0x48] sm:$0xff]
    %v89 = vld [vmem:[#allocation2 + $0x50] sm:$0xff]
    %v90 = vld [vmem:[#allocation2 + $0x58] sm:$0xff]
    %v91 = vld [vmem:[#allocation2 + $0x60] sm:$0xff]
    %v92 = vld [vmem:[#allocation2 + $0x68] sm:$0xff]
    %v93 = vld [vmem:[#allocation2 + $0x70] sm:$0xff]
    %v94 = vld [vmem:[#allocation2 + $0x78] sm:$0xff]
    %v95 = vld [vmem:[#allocation6] sm:$0xff]
    %v96 = vld [vmem:[#allocation6 + $0x8] sm:$0xff]
    %v97 = vld [vmem:[#allocation6 + $0x10] sm:$0xff]
    %v98 = vld [vmem:[#allocation6 + $0x18] sm:$0xff]
    %v99 = vld [vmem:[#allocation6 + $0x20] sm:$0xff]
    %v100 = vld [vmem:[#allocation6 + $0x28] sm:$0xff]
    %v101 = vld [vmem:[#allocation6 + $0x30] sm:$0xff]
    %v102 = vld [vmem:[#allocation6 + $0x38] sm:$0xff]
    %v103 = vld [vmem:[#allocation6 + $0x40] sm:$0xff]
    %v104 = vld [vmem:[#allocation6 + $0x48] sm:$0xff]
    %v105 = vld [vmem:[#allocation6 + $0x50] sm:$0xff]
    %v106 = vld [vmem:[#allocation6 + $0x58] sm:$0xff]
    %v107 = vld [vmem:[#allocation6 + $0x60] sm:$0xff]
    %v108 = vld [vmem:[#allocation6 + $0x68] sm:$0xff]
    %v109 = vld [vmem:[#allocation6 + $0x70] sm:$0xff]
    %v110 = vld [vmem:[#allocation6 + $0x78] sm:$0xff]
    %111 = vmatprep.subr.mxu0 0.0
    %112 = vmatpush1.msra.mxu0 %v95
    %113 = vmatprep.subr.mxu0 0.0
    %114 = vmatpush1.msra.mxu0 %v96
    %115 = vmatprep.subr.mxu0 0.0
    %116 = vmatpush1.msra.mxu0 %v97
    %117 = vmatprep.subr.mxu0 0.0
    %118 = vmatpush1.msra.mxu0 %v98
    %119 = vmatprep.subr.mxu0 0.0
    %120 = vmatpush1.msra.mxu0 %v99
    %121 = vmatprep.subr.mxu0 0.0
    %122 = vmatpush1.msra.mxu0 %v100
    %123 = vmatprep.subr.mxu0 0.0
    %124 = vmatpush1.msra.mxu0 %v101
    %125 = vmatprep.subr.mxu0 0.0
    %126 = vmatpush1.msra.mxu0 %v102
    %127 = vmatprep.subr.mxu0 0.0
    %128 = vmatpush1.msra.mxu0 %v103
    %129 = vmatprep.subr.mxu0 0.0
    %130 = vmatpush1.msra.mxu0 %v104
    %131 = vmatprep.subr.mxu0 0.0
    %132 = vmatpush1.msra.mxu0 %v105
    %133 = vmatprep.subr.mxu0 0.0
    %134 = vmatpush1.msra.mxu0 %v106
    %135 = vmatprep.subr.mxu0 0.0
    %136 = vmatpush1.msra.mxu0 %v107
    %137 = vmatprep.subr.mxu0 0.0
    %138 = vmatpush1.msra.mxu0 %v108
    %139 = vmatprep.subr.mxu0 0.0
    %140 = vmatpush1.msra.mxu0 %v109
    %141 = vmatprep.subr.mxu0 0.0
    %142 = vmatpush1.msra.mxu0 %v110
    %143 = vmatprep.subr.mxu0 0.0
    %144 = vmatpush1.msra.mxu0 0.0
    %145 = vmatprep.subr.mxu0 0.0
    %146 = vmatpush1.msra.mxu0 0.0
    %147 = vmatprep.subr.mxu0 0.0
    %148 = vmatpush1.msra.mxu0 0.0
    %149 = vmatprep.subr.mxu0 0.0
    %150 = vmatpush1.msra.mxu0 0.0
    %151 = vmatprep.subr.mxu0 0.0
    %152 = vmatpush1.msra.mxu0 0.0
    %153 = vmatprep.subr.mxu0 0.0
    %154 = vmatpush1.msra.mxu0 0.0
    %155 = vmatprep.subr.mxu0 0.0
    %156 = vmatpush1.msra.mxu0 0.0
    %157 = vmatprep.subr.mxu0 0.0
    %158 = vmatpush1.msra.mxu0 0.0
    %159 = vmatprep.subr.mxu0 0.0
    %160 = vmatpush1.msra.mxu0 0.0
    %161 = vmatprep.subr.mxu0 0.0
    %162 = vmatpush1.msra.mxu0 0.0
    %163 = vmatprep.subr.mxu0 0.0
    %164 = vmatpush1.msra.mxu0 0.0
    %165 = vmatprep.subr.mxu0 0.0
    %166 = vmatpush1.msra.mxu0 0.0
    %167 = vmatprep.subr.mxu0 0.0
    %168 = vmatpush1.msra.mxu0 0.0
    %169 = vmatprep.subr.mxu0 0.0
    %170 = vmatpush1.msra.mxu0 0.0
    %171 = vmatprep.subr.mxu0 0.0
    %172 = vmatpush1.msra.mxu0 0.0
    %173 = vmatprep.subr.mxu0 0.0
    %174 = vmatpush1.msra.mxu0 0.0
    %175 = vmatprep.mubr.f32.mxu0 0.0
    %176 = vmatmul.mubr.f32.gmra.mrb[0].mxu0 %v63
    %v177 = vpop.f32.mrb[0].mxu0
    %v178 = vadd.f32 0.0, %v177
    %v179 = vpop.f32.mrb[0].mxu0
    %180 = vmatprep.mubr.f32.mxu0 0.0
    %181 = vmatmul.mubr.f32.gmra.mrb[0].mxu0 %v64
    %v182 = vpop.f32.mrb[0].mxu0
    %v183 = vadd.f32 0.0, %v182
    %v184 = vpop.f32.mrb[0].mxu0
    %185 = vmatprep.mubr.f32.mxu0 0.0
    %186 = vmatmul.mubr.f32.gmra.mrb[0].mxu0 %v65
    %v187 = vpop.f32.mrb[0].mxu0
    %v188 = vadd.f32 0.0, %v187
    %v189 = vpop.f32.mrb[0].mxu0
    %190 = vmatprep.mubr.f32.mxu0 0.0
    %191 = vmatmul.mubr.f32.gmra.mrb[0].mxu0 %v66
    %v192 = vpop.f32.mrb[0].mxu0
    %v193 = vadd.f32 0.0, %v192
    %v194 = vpop.f32.mrb[0].mxu0
    %195 = vmatprep.mubr.f32.mxu0 0.0
    %196 = vmatmul.mubr.f32.gmra.mrb[0].mxu0 %v67
    %v197 = vpop.f32.mrb[0].mxu0
    %v198 = vadd.f32 0.0, %v197
    %v199 = vpop.f32.mrb[0].mxu0
    %200 = vmatprep.mubr.f32.mxu0 0.0
    %201 = vmatmul.mubr.f32.gmra.mrb[0].mxu0 %v68
    %v202 = vpop.f32.mrb[0].mxu0
    %v203 = vadd.f32 0.0, %v202
    %v204 = vpop.f32.mrb[0].mxu0
    %205 = vmatprep.mubr.f32.mxu0 0.0
    %206 = vmatmul.mubr.f32.gmra.mrb[0].mxu0 %v69
    %v207 = vpop.f32.mrb[0].mxu0
    %v208 = vadd.f32 0.0, %v207
    %v209 = vpop.f32.mrb[0].mxu0
    %210 = vmatprep.mubr.f32.mxu0 0.0
    %211 = vmatmul.mubr.f32.gmra.mrb[0].mxu0 %v70
    %v212 = vpop.f32.mrb[0].mxu0
    %v213 = vadd.f32 0.0, %v212
    %v214 = vpop.f32.mrb[0].mxu0
    %215 = vmatprep.mubr.f32.mxu0 0.0
    %216 = vmatmul.mubr.f32.gmra.mrb[0].mxu0 %v71
    %v217 = vpop.f32.mrb[0].mxu0
    %v218 = vadd.f32 0.0, %v217
    %v219 = vpop.f32.mrb[0].mxu0
    %220 = vmatprep.mubr.f32.mxu0 0.0
    %221 = vmatmul.mubr.f32.gmra.mrb[0].mxu0 %v72
    %v222 = vpop.f32.mrb[0].mxu0
    %v223 = vadd.f32 0.0, %v222
    %v224 = vpop.f32.mrb[0].mxu0
    %225 = vmatprep.mubr.f32.mxu0 0.0
    %226 = vmatmul.mubr.f32.gmra.mrb[0].mxu0 %v73
    %v227 = vpop.f32.mrb[0].mxu0
    %v228 = vadd.f32 0.0, %v227
    %v229 = vpop.f32.mrb[0].mxu0
    %230 = vmatprep.mubr.f32.mxu0 0.0
    %231 = vmatmul.mubr.f32.gmra.mrb[0].mxu0 %v74
    %v232 = vpop.f32.mrb[0].mxu0
    %v233 = vadd.f32 0.0, %v232
    %v234 = vpop.f32.mrb[0].mxu0
    %235 = vmatprep.mubr.f32.mxu0 0.0
    %236 = vmatmul.mubr.f32.gmra.mrb[0].mxu0 %v75
    %v237 = vpop.f32.mrb[0].mxu0
    %v238 = vadd.f32 0.0, %v237
    %v239 = vpop.f32.mrb[0].mxu0
    %240 = vmatprep.mubr.f32.mxu0 0.0
    %241 = vmatmul.mubr.f32.gmra.mrb[0].mxu0 %v76
    %v242 = vpop.f32.mrb[0].mxu0
    %v243 = vadd.f32 0.0, %v242
    %v244 = vpop.f32.mrb[0].mxu0
    %245 = vmatprep.mubr.f32.mxu0 0.0
    %246 = vmatmul.mubr.f32.gmra.mrb[0].mxu0 %v77
    %v247 = vpop.f32.mrb[0].mxu0
    %v248 = vadd.f32 0.0, %v247
    %v249 = vpop.f32.mrb[0].mxu0
    %250 = vmatprep.mubr.f32.mxu0 0.0
    %251 = vmatmul.mubr.f32.gmra.mrb[0].mxu0 %v78
    %v252 = vpop.f32.mrb[0].mxu0
    %v253 = vadd.f32 0.0, %v252
    %v254 = vpop.f32.mrb[0].mxu0
    %255 = vdwg.mxu0
    %v256 = vadd.f32 %v79, %v178
    %v257 = vadd.f32 %v80, %v183
    %v258 = vadd.f32 %v81, %v188
    %v259 = vadd.f32 %v82, %v193
    %v260 = vadd.f32 %v83, %v198
    %v261 = vadd.f32 %v84, %v203
    %v262 = vadd.f32 %v85, %v208
    %v263 = vadd.f32 %v86, %v213
    %v264 = vadd.f32 %v87, %v218
    %v265 = vadd.f32 %v88, %v223
    %v266 = vadd.f32 %v89, %v228
    %v267 = vadd.f32 %v90, %v233
    %v268 = vadd.f32 %v91, %v238
    %v269 = vadd.f32 %v92, %v243
    %v270 = vadd.f32 %v93, %v248
    %v271 = vadd.f32 %v94, %v253
    %272 = vst [vmem:[#allocation2] sm:$0xff] %v256
    %273 = vst [vmem:[#allocation2 + $0x8] sm:$0xff] %v257
    %274 = vst [vmem:[#allocation2 + $0x10] sm:$0xff] %v258
    %275 = vst [vmem:[#allocation2 + $0x18] sm:$0xff] %v259
    %276 = vst [vmem:[#allocation2 + $0x20] sm:$0xff] %v260
    %277 = vst [vmem:[#allocation2 + $0x28] sm:$0xff] %v261
    %278 = vst [vmem:[#allocation2 + $0x30] sm:$0xff] %v262
    %279 = vst [vmem:[#allocation2 + $0x38] sm:$0xff] %v263
    %280 = vst [vmem:[#allocation2 + $0x40] sm:$0xff] %v264
    %281 = vst [vmem:[#allocation2 + $0x48] sm:$0xff] %v265
    %282 = vst [vmem:[#allocation2 + $0x50] sm:$0xff] %v266
    %283 = vst [vmem:[#allocation2 + $0x58] sm:$0xff] %v267
    %284 = vst [vmem:[#allocation2 + $0x60] sm:$0xff] %v268
    %285 = vst [vmem:[#allocation2 + $0x68] sm:$0xff] %v269
    %286 = vst [vmem:[#allocation2 + $0x70] sm:$0xff] %v270
    %287 = vst [vmem:[#allocation2 + $0x78] sm:$0xff] %v271
    // Predicated region
    $region26: #{tpu_custom_call.1} parent=1 // pred_check
      %p288 = pneg %p43
    $region27: #{tpu_custom_call.1} parent=1 // pred_check_branch
      %290 = sbr.rel (%p288) target = $region29
    $region28: #{tpu_custom_call.1} parent=1 // pred_region
      %v291 = vld [vmem:[#allocation2] sm:$0xff]
      %v292 = vld [vmem:[#allocation2 + $0x8] sm:$0xff]
      %v293 = vld [vmem:[#allocation2 + $0x10] sm:$0xff]
      %v294 = vld [vmem:[#allocation2 + $0x18] sm:$0xff]
      %v295 = vld [vmem:[#allocation2 + $0x20] sm:$0xff]
      %v296 = vld [vmem:[#allocation2 + $0x28] sm:$0xff]
      %v297 = vld [vmem:[#allocation2 + $0x30] sm:$0xff]
      %v298 = vld [vmem:[#allocation2 + $0x38] sm:$0xff]
      %v299 = vld [vmem:[#allocation2 + $0x40] sm:$0xff]
      %v300 = vld [vmem:[#allocation2 + $0x48] sm:$0xff]
      %v301 = vld [vmem:[#allocation2 + $0x50] sm:$0xff]
      %v302 = vld [vmem:[#allocation2 + $0x58] sm:$0xff]
      %v303 = vld [vmem:[#allocation2 + $0x60] sm:$0xff]
      %v304 = vld [vmem:[#allocation2 + $0x68] sm:$0xff]
      %v305 = vld [vmem:[#allocation2 + $0x70] sm:$0xff]
      %v306 = vld [vmem:[#allocation2 + $0x78] sm:$0xff]
      %v307 = vld [vmem:[%s2] sm:$0x1]
      %v309 = vlaneseq
      %v310 = vshrl.u32 %v309, 7
      %v311 = vsub.s32 0, %v310
      %v312 = vrot.slane %v307, %v311
      %v314 = vadd.f32 %v291, %v312
      %v315 = vadd.f32 %v292, %v312
      %v316 = vadd.f32 %v293, %v312
      %v317 = vadd.f32 %v294, %v312
      %v318 = vadd.f32 %v295, %v312
      %v319 = vadd.f32 %v296, %v312
      %v320 = vadd.f32 %v297, %v312
      %v321 = vadd.f32 %v298, %v312
      %v322 = vadd.f32 %v299, %v312
      %v323 = vadd.f32 %v300, %v312
      %v324 = vadd.f32 %v301, %v312
      %v325 = vadd.f32 %v302, %v312
      %v326 = vadd.f32 %v303, %v312
      %v327 = vadd.f32 %v304, %v312
      %v328 = vadd.f32 %v305, %v312
      %v329 = vadd.f32 %v306, %v312
      %vm330 = vcmp.ge.f32.partialorder %v314, 0.0
      %vm331 = vcmp.ge.f32.partialorder %v315, 0.0
      %vm332 = vcmp.ge.f32.partialorder %v316, 0.0
      %vm333 = vcmp.ge.f32.partialorder %v317, 0.0
      %vm334 = vcmp.ge.f32.partialorder %v318, 0.0
      %vm335 = vcmp.ge.f32.partialorder %v319, 0.0
      %vm336 = vcmp.ge.f32.partialorder %v320, 0.0
      %vm337 = vcmp.ge.f32.partialorder %v321, 0.0
      %vm338 = vcmp.ge.f32.partialorder %v322, 0.0
      %vm339 = vcmp.ge.f32.partialorder %v323, 0.0
      %vm340 = vcmp.ge.f32.partialorder %v324, 0.0
      %vm341 = vcmp.ge.f32.partialorder %v325, 0.0
      %vm342 = vcmp.ge.f32.partialorder %v326, 0.0
      %vm343 = vcmp.ge.f32.partialorder %v327, 0.0
      %vm344 = vcmp.ge.f32.partialorder %v328, 0.0
      %vm345 = vcmp.ge.f32.partialorder %v329, 0.0
      %v346 = vmul.f32 %v314, 0.2
      %v347 = vmul.f32 %v315, 0.2
      %v348 = vmul.f32 %v316, 0.2
      %v349 = vmul.f32 %v317, 0.2
      %v350 = vmul.f32 %v318, 0.2
      %v351 = vmul.f32 %v319, 0.2
      %v352 = vmul.f32 %v320, 0.2
      %v353 = vmul.f32 %v321, 0.2
      %v354 = vmul.f32 %v322, 0.2
      %v355 = vmul.f32 %v323, 0.2
      %v356 = vmul.f32 %v324, 0.2
      %v357 = vmul.f32 %v325, 0.2
      %v358 = vmul.f32 %v326, 0.2
      %v359 = vmul.f32 %v327, 0.2
      %v360 = vmul.f32 %v328, 0.2
      %v361 = vmul.f32 %v329, 0.2
      %v362 = vsel %vm330, %v314, %v346
      %v363 = vsel %vm331, %v315, %v347
      %v364 = vsel %vm332, %v316, %v348
      %v365 = vsel %vm333, %v317, %v349
      %v366 = vsel %vm334, %v318, %v350
      %v367 = vsel %vm335, %v319, %v351
      %v368 = vsel %vm336, %v320, %v352
      %v369 = vsel %vm337, %v321, %v353
      %v370 = vsel %vm338, %v322, %v354
      %v371 = vsel %vm339, %v323, %v355
      %v372 = vsel %vm340, %v324, %v356
      %v373 = vsel %vm341, %v325, %v357
      %v374 = vsel %vm342, %v326, %v358
      %v375 = vsel %vm343, %v327, %v359
      %v376 = vsel %vm344, %v328, %v360
      %v377 = vsel %vm345, %v329, %v361
      %378 = vst [vmem:[#allocation8] sm:$0xff] %v362
      %379 = vst [vmem:[#allocation8 + $0x8] sm:$0xff] %v363
      %380 = vst [vmem:[#allocation8 + $0x10] sm:$0xff] %v364
      %381 = vst [vmem:[#allocation8 + $0x18] sm:$0xff] %v365
      %382 = vst [vmem:[#allocation8 + $0x20] sm:$0xff] %v366
      %383 = vst [vmem:[#allocation8 + $0x28] sm:$0xff] %v367
      %384 = vst [vmem:[#allocation8 + $0x30] sm:$0xff] %v368
      %385 = vst [vmem:[#allocation8 + $0x38] sm:$0xff] %v369
      %386 = vst [vmem:[#allocation8 + $0x40] sm:$0xff] %v370
      %387 = vst [vmem:[#allocation8 + $0x48] sm:$0xff] %v371
      %388 = vst [vmem:[#allocation8 + $0x50] sm:$0xff] %v372
      %389 = vst [vmem:[#allocation8 + $0x58] sm:$0xff] %v373
      %390 = vst [vmem:[#allocation8 + $0x60] sm:$0xff] %v374
      %391 = vst [vmem:[#allocation8 + $0x68] sm:$0xff] %v375
      %392 = vst [vmem:[#allocation8 + $0x70] sm:$0xff] %v376
      %393 = vst [vmem:[#allocation8 + $0x78] sm:$0xff] %v377
    $region29: #{tpu_custom_call.1} parent=1 // pred_fallthru
      _
    // Predicated region
    $region30: #{tpu_custom_call.1} parent=1 // pred_check
      _
    $region31: #{tpu_custom_call.1} parent=1 // pred_check_branch
      %395 = sbr.rel (0) target = $region33
    $region32: #{tpu_custom_call.1} parent=1 // pred_region
      %s397 = ssub.s32 2048, 2048
      %398 = vsyncadd [#allocation5], %s397
      %s399 = sshll.u32 [#allocation8], 4
      %s400 = int_to_ptr.vmem [resolvable:$true] %s399
      %405 = dma.vmem_to_hbm [thread:$0]  %s400, 2048, %s3, [#allocation5], 128, 128, 8
    $region33: #{tpu_custom_call.1} parent=1 // pred_fallthru
      _
    // Predicated region
    $region34: #{tpu_custom_call.1} parent=1 // pred_check
      _
    $region35: #{tpu_custom_call.1} parent=1 // pred_check_branch
      %407 = sbr.rel (0) target = $region37
    $region36: #{tpu_custom_call.1} parent=1 // pred_region
      %408 = dma.done [#allocation5], 2048
    $region37: #{tpu_custom_call.1} parent=1 // pred_fallthru
      _
    %409 = vsyncpa [#allocation4], 1
    %410 = vsyncpa [#allocation7], 1
    %411 = vsyncpa [#allocation5], 1

</llo_original>
